<compile_context>
chip_gen: v7x
topology: tpu7x:2x2x1
jax: 0.10.0
libtpu: 0.0.40
codegen_flags: <defaults>
</compile_context>

<pallas_src>
import functools
import math

import jax
import jax.numpy as jnp
from jax import lax
from jax.experimental import pallas as pl
from jax.experimental.pallas import tpu as pltpu


def _merge_kernel(x_ref, w_ref, b_ref, o_ref, *, compute_dtype):
    """2x2/stride-2 conv (+ folded BN) as two MXU matmuls over a row-pair block.

    x_ref: (R, 2, W2, 2C)  input image row-pairs (full width)
    w_ref: (4C, N)         BN-folded conv weight, rows ordered (kh, kw, c)
    b_ref: (1, N)          BN-folded bias (f32)
    o_ref: (R*W2, N)       output tile (N = out_dim, full extent)
    """
    R, _, W2, C2 = x_ref.shape
    rows = R * W2
    # Slice at the ref level and cast BEFORE the reshape: no full-tile f32
    # temporary, and any relayout moves half the bytes (bf16).
    xe = x_ref[:, 0, :, :].astype(compute_dtype).reshape(rows, C2)   # kh = 0 rows
    xo = x_ref[:, 1, :, :].astype(compute_dtype).reshape(rows, C2)   # kh = 1 rows
    w = w_ref[...]
    y = jnp.dot(xe, w[:C2, :], preferred_element_type=jnp.float32)
    y = y + jnp.dot(xo, w[C2:, :], preferred_element_type=jnp.float32)
    o_ref[...] = (y + b_ref[...]).astype(o_ref.dtype)


def _round_up(v, m):
    return (v + m - 1) // m * m


def _vmem_config():
    """(vmem_limit_bytes, tile_budget_bytes) derived from the chip generation."""
    cap = 128 * 1024 * 1024
    try:
        cap = int(pltpu.get_tpu_info().vmem_capacity_bytes)
    except Exception:
        pass
    if cap <= 64 * 1024 * 1024:                       # v7x-class: 64 MiB / TC
        return 52 * 1024 * 1024, 26 * 1024 * 1024
    return 100 * 1024 * 1024, 80 * 1024 * 1024        # v5e / v6e: 128 MiB


def _pick_row_pairs(g_rows, w2, c, n_out, in_bytes, cmp_bytes, out_bytes,
                    vmem_budget, max_tile_rows):
    """Largest 8-aligned row-pair count R (tile = R*W2 output rows) that fits.

    Constraints (from the perf review):
      * (R*W2) % 8 == 0 so the output block obeys the (8,128) sublane rule.
      * R <= ceil(g_rows/2) when possible, so the grid has >= 2 steps and both
        v7x TensorCores get work.
      * VMEM estimate includes pipelined buffers AND in-kernel temporaries
        (bf16 xe/xo copies + f32 accumulator), with a 1.25x safety factor.
      * No divisor requirement: the grid uses pl.cdiv (ragged last block OK).
    """
    c2 = 2 * c
    c2_lane = _round_up(c2, 128)
    n_lane = _round_up(n_out, 128)
    step = 8 // math.gcd(w2, 8)                  # smallest R with (R*W2) % 8 == 0
    r_cap = g_rows if g_rows < 2 * step else -(-g_rows // 2)

    def vmem_est(r):
        rows8 = _round_up(r * w2, 8)
        pipelined = (2 * r * 2 * _round_up(w2, 8) * c2_lane * in_bytes      # x, 2-buf
                     + _round_up(4 * c, 8) * n_lane * cmp_bytes             # w, 1-buf
                     + 8 * n_lane * 4                                       # b, 1-buf
                     + 2 * rows8 * n_lane * out_bytes)                      # out, 2-buf
        temps = (2 * rows8 * c2_lane * cmp_bytes                            # xe / xo
                 + rows8 * n_lane * 4)                                      # f32 accum
        return int(1.25 * (pipelined + temps))

    best = step                                   # aligned fallback even if tight
    r = step
    while r <= r_cap:
        if r * w2 > max_tile_rows:
            break
        if vmem_est(r) <= vmem_budget:
            best = r
        r += step
    return best


def conv_merging_forward(x, H, W, params, *, eps=1e-5,
                         compute_dtype=jnp.bfloat16,
                         out_dtype=None,
                         max_tile_rows=4096,
                         vmem_budget_bytes=None):
    """x: (B, H*W, C). Returns (B, (H//2)*(W//2), out_dim) in out_dtype (default x.dtype)."""
    B, L, C = x.shape
    assert L == H * W, "input feature has wrong size"
    assert H % 2 == 0 and W % 2 == 0, f"x size ({H}*{W}) are not even."
    out_dim = params["conv_w"].shape[0]
    H2, W2, C2, K = H // 2, W // 2, 2 * C, 4 * C
    out_dtype = x.dtype if out_dtype is None else out_dtype

    vmem_limit, default_budget = _vmem_config()
    if vmem_budget_bytes is None:
        vmem_budget_bytes = default_budget

    # ---- fold eval-mode BatchNorm into the conv weight & bias (tiny, one-off) ----
    scale_c = params["bn_gamma"] * lax.rsqrt(params["bn_var"] + eps)   # (C,)
    shift_c = params["bn_beta"] - params["bn_mean"] * scale_c          # (C,)
    # conv_w: (out, C, kh, kw) -> (kh, kw, C, out) -> (4C, out); rows (kh, kw, c)
    w_mat = params["conv_w"].transpose(2, 3, 1, 0).reshape(K, out_dim)
    w_fold = (jnp.tile(scale_c, 4)[:, None] * w_mat).astype(compute_dtype)  # (4C, out)
    b_fold = (params["conv_b"] + jnp.tile(shift_c, 4) @ w_mat
              ).astype(jnp.float32)[None, :]                                # (1, out)

    # ---- layout-preserving (free) reshape: (B, H*W, C) -> (B*H2, 2, W2, 2C) ----
    x5 = x.reshape(B * H2, 2, W2, C2)

    g_rows = B * H2                        # image row-pairs == output image rows
    R = _pick_row_pairs(g_rows, W2, C, out_dim,
                        x.dtype.itemsize, jnp.dtype(compute_dtype).itemsize,
                        jnp.dtype(out_dtype).itemsize,
                        vmem_budget_bytes, max_tile_rows)
    tile_rows = R * W2                     # output rows per grid step (8-aligned)
    M = g_rows * W2                        # total output rows = B*H2*W2
    grid = (pl.cdiv(g_rows, R),)           # ragged last block handled by Pallas

    flops = 2 * M * K * out_dim
    bytes_accessed = (x.size * x.dtype.itemsize
                      + w_fold.size * w_fold.dtype.itemsize
                      + b_fold.size * 4
                      + M * out_dim * jnp.dtype(out_dtype).itemsize)

    kernel = functools.partial(_merge_kernel, compute_dtype=compute_dtype)
    out = pl.pallas_call(
        kernel,
        out_shape=jax.ShapeDtypeStruct((M, out_dim), out_dtype),
        grid_spec=pltpu.PrefetchScalarGridSpec(
            num_scalar_prefetch=0,
            grid=grid,
            in_specs=[
                pl.BlockSpec((R, 2, W2, C2), lambda g: (g, 0, 0, 0)),   # input rows
                pl.BlockSpec((K, out_dim), lambda g: (0, 0),            # resident weight
                             pipeline_mode=pl.Buffered(1)),
                pl.BlockSpec((1, out_dim), lambda g: (0, 0),            # resident bias
                             pipeline_mode=pl.Buffered(1)),
            ],
            out_specs=pl.BlockSpec((tile_rows, out_dim), lambda g: (g, 0)),
        ),
        compiler_params=pltpu.CompilerParams(
            dimension_semantics=("parallel",),
            vmem_limit_bytes=vmem_limit),
        cost_estimate=pl.CostEstimate(flops=flops, transcendentals=0,
                                      bytes_accessed=bytes_accessed),
    )(x5, w_fold, b_fold)

    return out.reshape(B, H2 * W2, out_dim)       # layout-preserving (free)


def reference_forward(x, H, W, params, eps=1e-5):
    """Pure-JAX reference mirroring the PyTorch module (eval-mode BN)."""
    B, L, C = x.shape
    out_dim = params["conv_w"].shape[0]
    x_nchw = x.reshape(B, H, W, C).transpose(0, 3, 1, 2)
    scale = params["bn_gamma"] / jnp.sqrt(params["bn_var"] + eps)
    shift = params["bn_beta"] - params["bn_mean"] * scale
    xn = x_nchw * scale[None, :, None, None] + shift[None, :, None, None]
    y = lax.conv_general_dilated(
        xn, params["conv_w"], window_strides=(2, 2), padding="VALID",
        dimension_numbers=("NCHW", "OIHW", "NCHW"))
    y = y + params["conv_b"][None, :, None, None]
    return y.reshape(B, out_dim, -1).transpose(0, 2, 1)


if __name__ == "__main__":
    B, C, out_dim, H, W = 2, 4, 8, 16, 16

    key = jax.random.PRNGKey(0)
    ks = jax.random.split(key, 7)
    x = jax.random.normal(ks[0], (B, H * W, C), jnp.float32)

    # Deterministic synthetic parameters (shapes from the module __init__).
    params = {
        "conv_w": 0.1 * jax.random.normal(ks[1], (out_dim, C, 2, 2), jnp.float32),
        "conv_b": 0.1 * jax.random.normal(ks[2], (out_dim,), jnp.float32),
        "bn_gamma": 1.0 + 0.1 * jax.random.normal(ks[3], (C,), jnp.float32),
        "bn_beta": 0.1 * jax.random.normal(ks[4], (C,), jnp.float32),
        "bn_mean": 0.1 * jax.random.normal(ks[5], (C,), jnp.float32),
        "bn_var": 1.0 + 0.1 * jnp.abs(jax.random.normal(ks[6], (C,), jnp.float32)),
    }

    ref = reference_forward(x, H, W, params)

    # f32 compute path: verifies fused math (BN folding + conv-as-matmul) tightly.
    out_f32 = conv_merging_forward(x, H, W, params, compute_dtype=jnp.float32)
    jax.block_until_ready(out_f32)
    assert out_f32.shape == (B, (H // 2) * (W // 2), out_dim), out_f32.shape
    assert jnp.allclose(out_f32, ref, atol=1e-4, rtol=1e-4), (
        float(jnp.max(jnp.abs(out_f32 - ref))))

    # bf16 MXU path (f32 input/output, bf16 operands, f32 accumulation).
    out_bf16 = conv_merging_forward(x, H, W, params, compute_dtype=jnp.bfloat16)
    jax.block_until_ready(out_bf16)
    assert out_bf16.shape == (B, (H // 2) * (W // 2), out_dim), out_bf16.shape
    assert jnp.allclose(out_bf16, ref, atol=2e-2, rtol=2e-2), (
        float(jnp.max(jnp.abs(out_bf16 - ref))))

    # Fully bf16 I/O path (halves the dominant HBM read + writeback streams).
    out_b16io = conv_merging_forward(x.astype(jnp.bfloat16), H, W, params,
                                     compute_dtype=jnp.bfloat16,
                                     out_dtype=jnp.bfloat16)
    jax.block_until_ready(out_b16io)
    assert out_b16io.dtype == jnp.bfloat16
    assert jnp.allclose(out_b16io.astype(jnp.float32), ref, atol=3e-2, rtol=3e-2), (
        float(jnp.max(jnp.abs(out_b16io.astype(jnp.float32) - ref))))

    print("KERNEL_OK")
</pallas_src>

<mosaic_0001>
module attributes {stable_mosaic.version = 11 : i64} {
  func.func @_merge_kernel(%arg0: i32, %arg1: memref<8x2x8x8xf32, #tpu.memory_space<vmem>>, %arg2: memref<16x8xf32, #tpu.memory_space<vmem>>, %arg3: memref<1x8xf32, #tpu.memory_space<vmem>>, %arg4: memref<64x8xf32, #tpu.memory_space<vmem>>) attributes {dimension_semantics = [#tpu.dimension_semantics<parallel>], iteration_bounds = array<i64: 2>, scalar_prefetch = 0 : i64, scratch_operands = 0 : i64, tpu.core_type = #tpu.core_type<tc>, window_params = [{transform_indices = @transform_0, window_bounds = array<i64: 8, 2, 8, 8>}, {pipeline_mode = #tpu.pipeline_mode<synchronous>, transform_indices = @transform_1, window_bounds = array<i64: 16, 8>}, {pipeline_mode = #tpu.pipeline_mode<synchronous>, transform_indices = @transform_2, window_bounds = array<i64: 1, 8>}, {transform_indices = @transform_3, window_bounds = array<i64: 64, 8>}]} {
    %c0 = arith.constant 0 : index
    %c0_0 = arith.constant 0 : index
    %c0_1 = arith.constant 0 : index
    %c0_2 = arith.constant 0 : index
    %0 = vector.load %arg1[%c0, %c0_0, %c0_1, %c0_2] : memref<8x2x8x8xf32, #tpu.memory_space<vmem>>, vector<8x1x8x8xf32>
    %1 = vector.shape_cast %0 : vector<8x1x8x8xf32> to vector<8x8x8xf32>
    %2 = vector.shape_cast %1 : vector<8x8x8xf32> to vector<64x8xf32>
    %c0_3 = arith.constant 0 : index
    %c1 = arith.constant 1 : index
    %c0_4 = arith.constant 0 : index
    %c0_5 = arith.constant 0 : index
    %3 = vector.load %arg1[%c0_3, %c1, %c0_4, %c0_5] : memref<8x2x8x8xf32, #tpu.memory_space<vmem>>, vector<8x1x8x8xf32>
    %4 = vector.shape_cast %3 : vector<8x1x8x8xf32> to vector<8x8x8xf32>
    %5 = vector.shape_cast %4 : vector<8x8x8xf32> to vector<64x8xf32>
    %c0_6 = arith.constant 0 : index
    %c0_7 = arith.constant 0 : index
    %6 = vector.load %arg2[%c0_6, %c0_7] : memref<16x8xf32, #tpu.memory_space<vmem>>, vector<16x8xf32>
    %7 = vector.extract_strided_slice %6 {offsets = [0, 0], sizes = [8, 8], strides = [1, 1]} : vector<16x8xf32> to vector<8x8xf32>
    %cst = arith.constant dense<0.000000e+00> : vector<64x8xf32>
    %8 = tpu.matmul %2, %7, %cst {dimension_numbers = #tpu.dot_dimension_numbers<[1], [0], [0], [1], [0, 0, 1, 1], [], []>} : vector<64x8xf32>, vector<8x8xf32>, vector<64x8xf32> -> vector<64x8xf32>
    %9 = vector.extract_strided_slice %6 {offsets = [8, 0], sizes = [8, 8], strides = [1, 1]} : vector<16x8xf32> to vector<8x8xf32>
    %cst_8 = arith.constant dense<0.000000e+00> : vector<64x8xf32>
    %10 = tpu.matmul %5, %9, %cst_8 {dimension_numbers = #tpu.dot_dimension_numbers<[1], [0], [0], [1], [0, 0, 1, 1], [], []>} : vector<64x8xf32>, vector<8x8xf32>, vector<64x8xf32> -> vector<64x8xf32>
    %11 = arith.addf %8, %10 : vector<64x8xf32>
    %c0_9 = arith.constant 0 : index
    %c0_10 = arith.constant 0 : index
    %12 = vector.load %arg3[%c0_9, %c0_10] : memref<1x8xf32, #tpu.memory_space<vmem>>, vector<1x8xf32>
    %13 = vector.broadcast %12 : vector<1x8xf32> to vector<64x8xf32>
    %14 = arith.addf %11, %13 : vector<64x8xf32>
    %c0_11 = arith.constant 0 : index
    %c0_12 = arith.constant 0 : index
    %15 = vector.load %arg4[%c0_11, %c0_12] : memref<64x8xf32, #tpu.memory_space<vmem>>, vector<64x8xf32>
    tpu.vector_store %arg4[%c0_11, %c0_12], %14 {strides = array<i32>} : memref<64x8xf32, #tpu.memory_space<vmem>>, vector<64x8xf32>,
    return
  }
  func.func @transform_0(%arg0: i32) -> (i32, i32, i32, i32) {
    %c0_i32 = arith.constant 0 : i32
    %c0_i32_0 = arith.constant 0 : i32
    %c0_i32_1 = arith.constant 0 : i32
    %c0_i32_2 = arith.constant 0 : i32
    return %arg0, %c0_i32, %c0_i32_0, %c0_i32_1 : i32, i32, i32, i32
  }
  func.func @transform_1(%arg0: i32) -> (i32, i32) {
    %c0_i32 = arith.constant 0 : i32
    %c0_i32_0 = arith.constant 0 : i32
    %c0_i32_1 = arith.constant 0 : i32
    return %c0_i32, %c0_i32_0 : i32, i32
  }
  func.func @transform_2(%arg0: i32) -> (i32, i32) {
    %c0_i32 = arith.constant 0 : i32
    %c0_i32_0 = arith.constant 0 : i32
    %c0_i32_1 = arith.constant 0 : i32
    return %c0_i32, %c0_i32_0 : i32, i32
  }
  func.func @transform_3(%arg0: i32) -> (i32, i32) {
    %c0_i32 = arith.constant 0 : i32
    %c0_i32_0 = arith.constant 0 : i32
    return %arg0, %c0_i32 : i32, i32
  }
}

</mosaic_0001>

<llo_original>
// kernel: tpu_custom_call.1
$region0: #{tpu_custom_call.1}
  #allocation0 [shape = 'u32[]', space=smem, size = 0x4, offset = 0x4, fixed_abs, tag = 'smem constant byte address 0x4 - core index']
  #allocation1 [shape = 'u32[144,128]{1,0:T(1,128)}', space=vmem, size = 0x12000, scoped, tag = 'internal scratch']
  %s0 = inlined_call_operand.hbm [shape: f32[16,2,8,8], index: 0, kind: input, shape index: {}]
  %s1 = inlined_call_operand.hbm [shape: f32[16,8], index: 1, kind: input, shape index: {}]
  %s2 = inlined_call_operand.hbm [shape: f32[1,8], index: 2, kind: input, shape index: {}]
  %s3 = inlined_call_operand.hbm [shape: f32[128,8], index: 3, kind: output, shape index: {}]
  %s4 = sld [smem:[#allocation0]]
  $region57: #{tpu_custom_call.1} parent=0
    _
  %s6 = ssub.s32 1, %s4
  %s7 = scalar_select 0, %s6, %s4
  $region1: #{tpu_custom_call.1} parent=0
    #allocation2 [shape = 'u8[131072]{0}', space=vmem, size = 0x20000, scoped, tag = 'input window, operand 0']
    #allocation3 [shape = 's32[2]{0}', space=sflag, size = 0x8, scoped, tag = 'scoped memory for tpu_custom_call.1']
    #allocation4 [shape = 's32[2]{0}', space=sflag, size = 0x8, scoped, tag = 'scoped memory for tpu_custom_call.1']
    #allocation5 [shape = 'u8[8192]{0}', space=vmem, size = 0x2000, scoped, tag = 'input window, operand 1, single buffered']
    #allocation6 [shape = 's32[1]{0}', space=sflag, size = 0x4, scoped, tag = 'scoped memory for tpu_custom_call.1']
    #allocation7 [shape = 'u8[512]{0}', space=vmem, size = 0x400, scoped, tag = 'input window, operand 2, single buffered']
    #allocation8 [shape = 'u8[65536]{0}', space=vmem, size = 0x10000, scoped, tag = 'output window, operand 0']
    %8 = vsyncpa [#allocation3], 0
    %s9 = scalar_lea.sflag [#allocation3], 1
    %10 = vsyncpa %s9, 0
    %11 = vsyncpa [#allocation6], 0
    %12 = vsyncpa [#allocation4], 0
    %s13 = scalar_lea.sflag [#allocation4], 1
    %14 = vsyncpa %s13, 0
    loop: start=0, step=1, limit=4
    $region2: #{tpu_custom_call.1} parent=1 // loop_pre_header
      _
    $region3: #{tpu_custom_call.1} parent=1 // loop_header
      %s16 = sphi 0, %s20
      %p17 = scmp.ge.s32.totalorder %s16, 4
      %s26 = sphi 0, %s28
      %s29 = sphi 0, %s26
      %s30 = sphi 0, %s29
      %s46 = sphi 0, %s30
      %s50 = sphi 0, %s50
      %s52 = sphi 0, %s50
      %s53 = sphi 0, %s52
      %s67 = sphi 0, %s53
      %s71 = sphi 0, %s71
      %s73 = sphi 0, %s71
      %s74 = sphi 0, %s73
      %s88 = sphi 0, %s74
      %s94 = sphi 0, %s96
      %s97 = sphi 0, %s94
      %s98 = sphi 0, %s97
      %s114 = sphi 0, %s98
    $region4: #{tpu_custom_call.1} parent=1 // loop_header_branch
      %19 = sbr.rel (%p17) target = $region8
    $region5: #{tpu_custom_call.1} parent=1 // loop_body
      %s21 = ssub.s32 %s16, 1
      %s22 = ssub.s32 %s16, 2
      %s23 = sadd.s32 %s16, 1
      %s24 = ssub.s32 %s16, %s23
      %p25 = scmp.eq.s32.totalorder %s24, 0
      %s27 = sadd.s32 %s26, 1
      %s28 = scalar_select %p25, %s26, %s27
      %p31 = pneg %p25
      %p32 = scmp.eq.s32.totalorder %s16, 1
      %p33 = por %p31, %p32
      %p34 = scmp.ne.s32.totalorder %s26, %s29
      %p35 = scmp.eq.s32.totalorder %s16, 0
      %p36 = por %p34, %p35
      %p37 = scmp.ne.s32.totalorder %s26, %s29
      %p38 = scmp.eq.s32.totalorder %s21, 1
      %p39 = por %p37, %p38
      %p40 = scmp.ne.s32.totalorder %s29, %s30
      %p41 = scmp.eq.s32.totalorder %s21, 0
      %p42 = por %p40, %p41
      %p43 = scmp.ne.s32.totalorder %s29, %s30
      %p44 = scmp.eq.s32.totalorder %s22, 1
      %p45 = por %p43, %p44
      %p47 = scmp.ne.s32.totalorder %s30, %s46
      %p48 = scmp.eq.s32.totalorder %s22, 0
      %p49 = por %p47, %p48
      %s51 = sadd.s32 %s50, 1
      %p54 = scmp.eq.s32.totalorder %s16, 1
      %p55 = scmp.ne.s32.totalorder %s50, %s52
      %p56 = scmp.eq.s32.totalorder %s16, 0
      %p57 = por %p55, %p56
      %p58 = scmp.ne.s32.totalorder %s50, %s52
      %p59 = scmp.eq.s32.totalorder %s21, 1
      %p60 = por %p58, %p59
      %p61 = scmp.ne.s32.totalorder %s52, %s53
      %p62 = scmp.eq.s32.totalorder %s21, 0
      %p63 = por %p61, %p62
      %p64 = scmp.ne.s32.totalorder %s52, %s53
      %p65 = scmp.eq.s32.totalorder %s22, 1
      %p66 = por %p64, %p65
      %p68 = scmp.ne.s32.totalorder %s53, %s67
      %p69 = scmp.eq.s32.totalorder %s22, 0
      %p70 = por %p68, %p69
      %s72 = sadd.s32 %s71, 1
      %p75 = scmp.eq.s32.totalorder %s16, 1
      %p76 = scmp.ne.s32.totalorder %s71, %s73
      %p77 = scmp.eq.s32.totalorder %s16, 0
      %p78 = por %p76, %p77
      %p79 = scmp.ne.s32.totalorder %s71, %s73
      %p80 = scmp.eq.s32.totalorder %s21, 1
      %p81 = por %p79, %p80
      %p82 = scmp.ne.s32.totalorder %s73, %s74
      %p83 = scmp.eq.s32.totalorder %s21, 0
      %p84 = por %p82, %p83
      %p85 = scmp.ne.s32.totalorder %s73, %s74
      %p86 = scmp.eq.s32.totalorder %s22, 1
      %p87 = por %p85, %p86
      %p89 = scmp.ne.s32.totalorder %s74, %s88
      %p90 = scmp.eq.s32.totalorder %s22, 0
      %p91 = por %p89, %p90
      %s92 = ssub.s32 %s16, %s23
      %p93 = scmp.eq.s32.totalorder %s92, 0
      %s95 = sadd.s32 %s94, 1
      %s96 = scalar_select %p93, %s94, %s95
      %p99 = pneg %p93
      %p100 = scmp.eq.s32.totalorder %s16, 1
      %p101 = por %p99, %p100
      %p102 = scmp.ne.s32.totalorder %s94, %s97
      %p103 = scmp.eq.s32.totalorder %s16, 0
      %p104 = por %p102, %p103
      %p105 = scmp.ne.s32.totalorder %s94, %s97
      %p106 = scmp.eq.s32.totalorder %s21, 1
      %p107 = por %p105, %p106
      %p108 = scmp.ne.s32.totalorder %s97, %s98
      %p109 = scmp.eq.s32.totalorder %s21, 0
      %p110 = por %p108, %p109
      %p111 = scmp.ne.s32.totalorder %s97, %s98
      %p112 = scmp.eq.s32.totalorder %s22, 1
      %p113 = por %p111, %p112
      %p115 = scmp.ne.s32.totalorder %s98, %s114
      %p116 = scmp.eq.s32.totalorder %s22, 0
      %p117 = por %p115, %p116
      %p118 = scmp.le.s32.totalorder 1, %s16
      %p119 = scmp.lt.s32.totalorder %s16, 3
      %p120 = pnand %p118, %p119
      %p121 = pneg %p120
      // Predicated region
      $region9: #{tpu_custom_call.1} parent=5 // pred_check
        _
      $region10: #{tpu_custom_call.1} parent=5 // pred_check_branch
        %123 = sbr.rel (%p120) target = $region12
      $region11: #{tpu_custom_call.1} parent=5 // pred_region
        %s124 = ssub.s32 %s16, 1
        // Predicated region
        $region13: #{tpu_custom_call.1} parent=11 // pred_check
          %p125 = pneg %p63
        $region14: #{tpu_custom_call.1} parent=11 // pred_check_branch
          %127 = sbr.rel (%p125) target = $region16
        $region15: #{tpu_custom_call.1} parent=11 // pred_region
          %s129 = ssub.s32 256, 256
          %130 = vsyncadd [#allocation6], %s129
          %s131 = sshll.u32 [#allocation5], 4
          %s132 = int_to_ptr.vmem [resolvable:$true] %s131
          %137 = dma.hbm_to_vmem [thread:$0]  %s1, 256, %s132, [#allocation6], 128, 128, 8
        $region16: #{tpu_custom_call.1} parent=11 // pred_fallthru
          _
        // Predicated region
        $region17: #{tpu_custom_call.1} parent=11 // pred_check
          %p138 = pneg %p84
        $region18: #{tpu_custom_call.1} parent=11 // pred_check_branch
          %140 = sbr.rel (%p138) target = $region20
        $region19: #{tpu_custom_call.1} parent=11 // pred_region
          %s142 = ssub.s32 16, 16
          %143 = vsyncadd [#allocation6], %s142
          %s145 = sshll.u32 [#allocation7], 4
          %s146 = int_to_ptr.vmem [resolvable:$true] %s145
          %148 = dma.hbm_to_vmem [thread:$0]  %s2, 16, %s146, [#allocation6]
        $region20: #{tpu_custom_call.1} parent=11 // pred_fallthru
          _
      $region12: #{tpu_custom_call.1} parent=5 // pred_fallthru
        _
      %p149 = scmp.lt.s32.totalorder %s16, 2
      // Predicated region
      $region21: #{tpu_custom_call.1} parent=5 // pred_check
        %p150 = pneg %p149
      $region22: #{tpu_custom_call.1} parent=5 // pred_check_branch
        %152 = sbr.rel (%p150) target = $region24
      $region23: #{tpu_custom_call.1} parent=5 // pred_region
        // Predicated region
        $region25: #{tpu_custom_call.1} parent=23 // pred_check
          %p153 = pneg %p36
        $region26: #{tpu_custom_call.1} parent=23 // pred_check_branch
          %155 = sbr.rel (%p153) target = $region28
        $region27: #{tpu_custom_call.1} parent=23 // pred_region
          %s156 = sand.u32 %s26, 1
          %s157 = scalar_lea.sflag [#allocation3], %s156
          %s158 = sand.u32 %s26, 1
          %s159 = smul.addr %s158, 128
          %s160 = scalar_lea.vmem [#allocation2], %s159
          %s161 = smul.u32 8, %s16
          %s163 = ssub.s32 2048, 2048
          %164 = vsyncadd %s157, %s163
          %s165 = smul.addr %s161, 2
          %s166 = smul.addr %s165, 128
          %s167 = scalar_lea.hbm %s0, %s166
          %s168 = sshll.u32 %s160, 4
          %s169 = int_to_ptr.vmem [resolvable:$true] %s168
          %174 = dma.hbm_to_vmem [thread:$0]  %s167, 2048, %s169, %s157, 128, 128, 8
        $region28: #{tpu_custom_call.1} parent=23 // pred_fallthru
          _
      $region24: #{tpu_custom_call.1} parent=5 // pred_fallthru
        _
      %p175 = scmp.le.s32.totalorder 1, %s16
      %p176 = scmp.lt.s32.totalorder %s16, 3
      %p177 = pnand %p175, %p176
      %p178 = pneg %p177
      // Predicated region
      $region29: #{tpu_custom_call.1} parent=5 // pred_check
        _
      $region30: #{tpu_custom_call.1} parent=5 // pred_check_branch
        %180 = sbr.rel (%p177) target = $region32
      $region31: #{tpu_custom_call.1} parent=5 // pred_region
        %s181 = ssub.s32 %s16, 1
        %s182 = sand.u32 %s29, 1
        %s183 = scalar_lea.sflag [#allocation3], %s182
        %s184 = sand.u32 %s29, 1
        %s185 = smul.addr %s184, 128
        %s186 = scalar_lea.vmem [#allocation2], %s185
        // Predicated region
        $region33: #{tpu_custom_call.1} parent=31 // pred_check
          %p187 = pneg %p42
        $region34: #{tpu_custom_call.1} parent=31 // pred_check_branch
          %189 = sbr.rel (%p187) target = $region36
        $region35: #{tpu_custom_call.1} parent=31 // pred_region
          %190 = dma.done %s183, 2048
        $region36: #{tpu_custom_call.1} parent=31 // pred_fallthru
          _
        // Predicated region
        $region37: #{tpu_custom_call.1} parent=31 // pred_check
          %p191 = pneg %p63
        $region38: #{tpu_custom_call.1} parent=31 // pred_check_branch
          %193 = sbr.rel (%p191) target = $region40
        $region39: #{tpu_custom_call.1} parent=31 // pred_region
          %194 = dma.done [#allocation6], 256
        $region40: #{tpu_custom_call.1} parent=31 // pred_fallthru
          _
        // Predicated region
        $region41: #{tpu_custom_call.1} parent=31 // pred_check
          %p195 = pneg %p84
        $region42: #{tpu_custom_call.1} parent=31 // pred_check_branch
          %197 = sbr.rel (%p195) target = $region44
        $region43: #{tpu_custom_call.1} parent=31 // pred_region
          %198 = dma.done [#allocation6], 16
        $region44: #{tpu_custom_call.1} parent=31 // pred_fallthru
          _
        %s199 = sand.u32 %s29, 1
        %s200 = scalar_lea.sflag [#allocation3], %s199
        %s201 = sand.u32 %s29, 1
        %s202 = smul.addr %s201, 128
        %s203 = scalar_lea.vmem [#allocation2], %s202
        %p204 = pneg %p42
        %p205 = pneg %p39
        %p206 = pneg %p63
        %p207 = pneg %p60
        %p208 = pneg %p84
        %p209 = pneg %p81
        %p210 = pneg %p110
        %p211 = pneg %p107
        %s212 = sand.u32 %s97, 1
        %s213 = scalar_lea.sflag [#allocation4], %s212
        %s214 = sand.u32 %s97, 1
        %s215 = smul.addr %s214, 64
        %s216 = scalar_lea.vmem [#allocation8], %s215
        %s217 = smul.u32 8, %s21
        %s218 = smul.u32 8, %s21
        %v219 = vld [vmem:[%s186] sm:$0xff]
        %v220 = vld [vmem:[%s186 + $0x10] sm:$0xff]
        %v221 = vld [vmem:[%s186 + $0x20] sm:$0xff]
        %v222 = vld [vmem:[%s186 + $0x30] sm:$0xff]
        %v223 = vld [vmem:[%s186 + $0x40] sm:$0xff]
        %v224 = vld [vmem:[%s186 + $0x50] sm:$0xff]
        %v225 = vld [vmem:[%s186 + $0x60] sm:$0xff]
        %v226 = vld [vmem:[%s186 + $0x70] sm:$0xff]
        %s227 = scalar_lea.vmem %s186, 8 [#allocation2]
        %v228 = vld [vmem:[%s227] sm:$0xff]
        %v229 = vld [vmem:[%s227 + $0x10] sm:$0xff]
        %v230 = vld [vmem:[%s227 + $0x20] sm:$0xff]
        %v231 = vld [vmem:[%s227 + $0x30] sm:$0xff]
        %v232 = vld [vmem:[%s227 + $0x40] sm:$0xff]
        %v233 = vld [vmem:[%s227 + $0x50] sm:$0xff]
        %v234 = vld [vmem:[%s227 + $0x60] sm:$0xff]
        %v235 = vld [vmem:[%s227 + $0x70] sm:$0xff]
        %v236 = vld [vmem:[#allocation5] sm:$0xff]
        %v237 = vld [vmem:[#allocation5 + $0x8] sm:$0xff]
        %vm238 = vcmask 64512
        %v240 = vsel %vm238, %v228, 0
        %v243 = vsel %vm238, %v229, 0
        %v246 = vsel %vm238, %v230, 0
        %v249 = vsel %vm238, %v231, 0
        %v252 = vsel %vm238, %v232, 0
        %v255 = vsel %vm238, %v233, 0
        %v258 = vsel %vm238, %v234, 0
        %v261 = vsel %vm238, %v235, 0
        %263 = vmatprep.subr.mxu0 0.0
        %264 = vmatpush1.msra.mxu0 %v237
        %265 = vmatprep.subr.mxu0 0.0
        %266 = vmatpush1.msra.mxu0 0.0
        %267 = vmatprep.subr.mxu0 0.0
        %268 = vmatpush1.msra.mxu0 0.0
        %269 = vmatprep.subr.mxu0 0.0
        %270 = vmatpush1.msra.mxu0 0.0
        %271 = vmatprep.subr.mxu0 0.0
        %272 = vmatpush1.msra.mxu0 0.0
        %273 = vmatprep.subr.mxu0 0.0
        %274 = vmatpush1.msra.mxu0 0.0
        %275 = vmatprep.subr.mxu0 0.0
        %276 = vmatpush1.msra.mxu0 0.0
        %277 = vmatprep.subr.mxu0 0.0
        %278 = vmatpush1.msra.mxu0 0.0
        %279 = vmatprep.subr.mxu0 0.0
        %280 = vmatpush1.msra.mxu0 0.0
        %281 = vmatprep.subr.mxu0 0.0
        %282 = vmatpush1.msra.mxu0 0.0
        %283 = vmatprep.subr.mxu0 0.0
        %284 = vmatpush1.msra.mxu0 0.0
        %285 = vmatprep.subr.mxu0 0.0
        %286 = vmatpush1.msra.mxu0 0.0
        %287 = vmatprep.subr.mxu0 0.0
        %288 = vmatpush1.msra.mxu0 0.0
        %289 = vmatprep.subr.mxu0 0.0
        %290 = vmatpush1.msra.mxu0 0.0
        %291 = vmatprep.subr.mxu0 0.0
        %292 = vmatpush1.msra.mxu0 0.0
        %293 = vmatprep.subr.mxu0 0.0
        %294 = vmatpush1.msra.mxu0 0.0
        %295 = vmatprep.subr.mxu0 0.0
        %296 = vmatpush1.msra.mxu0 0.0
        %297 = vmatprep.subr.mxu0 0.0
        %298 = vmatpush1.msra.mxu0 0.0
        %299 = vmatprep.subr.mxu0 0.0
        %300 = vmatpush1.msra.mxu0 0.0
        %301 = vmatprep.subr.mxu0 0.0
        %302 = vmatpush1.msra.mxu0 0.0
        %303 = vmatprep.subr.mxu0 0.0
        %304 = vmatpush1.msra.mxu0 0.0
        %305 = vmatprep.subr.mxu0 0.0
        %306 = vmatpush1.msra.mxu0 0.0
        %307 = vmatprep.subr.mxu0 0.0
        %308 = vmatpush1.msra.mxu0 0.0
        %309 = vmatprep.subr.mxu0 0.0
        %310 = vmatpush1.msra.mxu0 0.0
        %311 = vmatprep.subr.mxu0 0.0
        %312 = vmatpush1.msra.mxu0 0.0
        %313 = vmatprep.subr.mxu0 0.0
        %314 = vmatpush1.msra.mxu0 0.0
        %315 = vmatprep.subr.mxu0 0.0
        %316 = vmatpush1.msra.mxu0 0.0
        %317 = vmatprep.subr.mxu0 0.0
        %318 = vmatpush1.msra.mxu0 0.0
        %319 = vmatprep.subr.mxu0 0.0
        %320 = vmatpush1.msra.mxu0 0.0
        %321 = vmatprep.subr.mxu0 0.0
        %322 = vmatpush1.msra.mxu0 0.0
        %323 = vmatprep.subr.mxu0 0.0
        %324 = vmatpush1.msra.mxu0 0.0
        %325 = vmatprep.subr.mxu0 0.0
        %326 = vmatpush1.msra.mxu0 0.0
        %327 = vmatprep.mubr.f32.mxu0 0.0
        %328 = vmatmul.mubr.f32.gmra.mrb[0].mxu0 %v240
        %v329 = vpop.f32.mrb[0].mxu0
        %v330 = vadd.f32 0.0, %v329
        %v331 = vpop.f32.mrb[0].mxu0
        %332 = vmatprep.mubr.f32.mxu0 0.0
        %333 = vmatmul.mubr.f32.gmra.mrb[0].mxu0 %v243
        %v334 = vpop.f32.mrb[0].mxu0
        %v335 = vadd.f32 0.0, %v334
        %v336 = vpop.f32.mrb[0].mxu0
        %337 = vmatprep.mubr.f32.mxu0 0.0
        %338 = vmatmul.mubr.f32.gmra.mrb[0].mxu0 %v246
        %v339 = vpop.f32.mrb[0].mxu0
        %v340 = vadd.f32 0.0, %v339
        %v341 = vpop.f32.mrb[0].mxu0
        %342 = vmatprep.mubr.f32.mxu0 0.0
        %343 = vmatmul.mubr.f32.gmra.mrb[0].mxu0 %v249
        %v344 = vpop.f32.mrb[0].mxu0
        %v345 = vadd.f32 0.0, %v344
        %v346 = vpop.f32.mrb[0].mxu0
        %347 = vmatprep.mubr.f32.mxu0 0.0
        %348 = vmatmul.mubr.f32.gmra.mrb[0].mxu0 %v252
        %v349 = vpop.f32.mrb[0].mxu0
        %v350 = vadd.f32 0.0, %v349
        %v351 = vpop.f32.mrb[0].mxu0
        %352 = vmatprep.mubr.f32.mxu0 0.0
        %353 = vmatmul.mubr.f32.gmra.mrb[0].mxu0 %v255
        %v354 = vpop.f32.mrb[0].mxu0
        %v355 = vadd.f32 0.0, %v354
        %v356 = vpop.f32.mrb[0].mxu0
        %357 = vmatprep.mubr.f32.mxu0 0.0
        %358 = vmatmul.mubr.f32.gmra.mrb[0].mxu0 %v258
        %v359 = vpop.f32.mrb[0].mxu0
        %v360 = vadd.f32 0.0, %v359
        %v361 = vpop.f32.mrb[0].mxu0
        %362 = vmatprep.mubr.f32.mxu0 0.0
        %363 = vmatmul.mubr.f32.gmra.mrb[0].mxu0 %v261
        %v364 = vpop.f32.mrb[0].mxu0
        %v365 = vadd.f32 0.0, %v364
        %v366 = vpop.f32.mrb[0].mxu0
        %367 = vdwg.mxu0
        %v369 = vsel %vm238, %v219, 0
        %v372 = vsel %vm238, %v220, 0
        %v375 = vsel %vm238, %v221, 0
        %v378 = vsel %vm238, %v222, 0
        %v381 = vsel %vm238, %v223, 0
        %v384 = vsel %vm238, %v224, 0
        %v387 = vsel %vm238, %v225, 0
        %v390 = vsel %vm238, %v226, 0
        %392 = vmatprep.subr.mxu0 0.0
        %393 = vmatpush1.msra.mxu0 %v236
        %394 = vmatprep.subr.mxu0 0.0
        %395 = vmatpush1.msra.mxu0 0.0
        %396 = vmatprep.subr.mxu0 0.0
        %397 = vmatpush1.msra.mxu0 0.0
        %398 = vmatprep.subr.mxu0 0.0
        %399 = vmatpush1.msra.mxu0 0.0
        %400 = vmatprep.subr.mxu0 0.0
        %401 = vmatpush1.msra.mxu0 0.0
        %402 = vmatprep.subr.mxu0 0.0
        %403 = vmatpush1.msra.mxu0 0.0
        %404 = vmatprep.subr.mxu0 0.0
        %405 = vmatpush1.msra.mxu0 0.0
        %406 = vmatprep.subr.mxu0 0.0
        %407 = vmatpush1.msra.mxu0 0.0
        %408 = vmatprep.subr.mxu0 0.0
        %409 = vmatpush1.msra.mxu0 0.0
        %410 = vmatprep.subr.mxu0 0.0
        %411 = vmatpush1.msra.mxu0 0.0
        %412 = vmatprep.subr.mxu0 0.0
        %413 = vmatpush1.msra.mxu0 0.0
        %414 = vmatprep.subr.mxu0 0.0
        %415 = vmatpush1.msra.mxu0 0.0
        %416 = vmatprep.subr.mxu0 0.0
        %417 = vmatpush1.msra.mxu0 0.0
        %418 = vmatprep.subr.mxu0 0.0
        %419 = vmatpush1.msra.mxu0 0.0
        %420 = vmatprep.subr.mxu0 0.0
        %421 = vmatpush1.msra.mxu0 0.0
        %422 = vmatprep.subr.mxu0 0.0
        %423 = vmatpush1.msra.mxu0 0.0
        %424 = vmatprep.subr.mxu0 0.0
        %425 = vmatpush1.msra.mxu0 0.0
        %426 = vmatprep.subr.mxu0 0.0
        %427 = vmatpush1.msra.mxu0 0.0
        %428 = vmatprep.subr.mxu0 0.0
        %429 = vmatpush1.msra.mxu0 0.0
        %430 = vmatprep.subr.mxu0 0.0
        %431 = vmatpush1.msra.mxu0 0.0
        %432 = vmatprep.subr.mxu0 0.0
        %433 = vmatpush1.msra.mxu0 0.0
        %434 = vmatprep.subr.mxu0 0.0
        %435 = vmatpush1.msra.mxu0 0.0
        %436 = vmatprep.subr.mxu0 0.0
        %437 = vmatpush1.msra.mxu0 0.0
        %438 = vmatprep.subr.mxu0 0.0
        %439 = vmatpush1.msra.mxu0 0.0
        %440 = vmatprep.subr.mxu0 0.0
        %441 = vmatpush1.msra.mxu0 0.0
        %442 = vmatprep.subr.mxu0 0.0
        %443 = vmatpush1.msra.mxu0 0.0
        %444 = vmatprep.subr.mxu0 0.0
        %445 = vmatpush1.msra.mxu0 0.0
        %446 = vmatprep.subr.mxu0 0.0
        %447 = vmatpush1.msra.mxu0 0.0
        %448 = vmatprep.subr.mxu0 0.0
        %449 = vmatpush1.msra.mxu0 0.0
        %450 = vmatprep.subr.mxu0 0.0
        %451 = vmatpush1.msra.mxu0 0.0
        %452 = vmatprep.subr.mxu0 0.0
        %453 = vmatpush1.msra.mxu0 0.0
        %454 = vmatprep.subr.mxu0 0.0
        %455 = vmatpush1.msra.mxu0 0.0
        %456 = vmatprep.mubr.f32.mxu0 0.0
        %457 = vmatmul.mubr.f32.gmra.mrb[0].mxu0 %v369
        %v458 = vpop.f32.mrb[0].mxu0
        %v459 = vadd.f32 %v330, %v458
        %v460 = vpop.f32.mrb[0].mxu0
        %461 = vmatprep.mubr.f32.mxu0 0.0
        %462 = vmatmul.mubr.f32.gmra.mrb[0].mxu0 %v372
        %v463 = vpop.f32.mrb[0].mxu0
        %v464 = vadd.f32 %v335, %v463
        %v465 = vpop.f32.mrb[0].mxu0
        %466 = vmatprep.mubr.f32.mxu0 0.0
        %467 = vmatmul.mubr.f32.gmra.mrb[0].mxu0 %v375
        %v468 = vpop.f32.mrb[0].mxu0
        %v469 = vadd.f32 %v340, %v468
        %v470 = vpop.f32.mrb[0].mxu0
        %471 = vmatprep.mubr.f32.mxu0 0.0
        %472 = vmatmul.mubr.f32.gmra.mrb[0].mxu0 %v378
        %v473 = vpop.f32.mrb[0].mxu0
        %v474 = vadd.f32 %v345, %v473
        %v475 = vpop.f32.mrb[0].mxu0
        %476 = vmatprep.mubr.f32.mxu0 0.0
        %477 = vmatmul.mubr.f32.gmra.mrb[0].mxu0 %v381
        %v478 = vpop.f32.mrb[0].mxu0
        %v479 = vadd.f32 %v350, %v478
        %v480 = vpop.f32.mrb[0].mxu0
        %481 = vmatprep.mubr.f32.mxu0 0.0
        %482 = vmatmul.mubr.f32.gmra.mrb[0].mxu0 %v384
        %v483 = vpop.f32.mrb[0].mxu0
        %v484 = vadd.f32 %v355, %v483
        %v485 = vpop.f32.mrb[0].mxu0
        %486 = vmatprep.mubr.f32.mxu0 0.0
        %487 = vmatmul.mubr.f32.gmra.mrb[0].mxu0 %v387
        %v488 = vpop.f32.mrb[0].mxu0
        %v489 = vadd.f32 %v360, %v488
        %v490 = vpop.f32.mrb[0].mxu0
        %491 = vmatprep.mubr.f32.mxu0 0.0
        %492 = vmatmul.mubr.f32.gmra.mrb[0].mxu0 %v390
        %v493 = vpop.f32.mrb[0].mxu0
        %v494 = vadd.f32 %v365, %v493
        %v495 = vpop.f32.mrb[0].mxu0
        %496 = vdwg.mxu0
        %v497 = vld [vmem:[#allocation7] sm:$0x1]
        %v499 = vlaneseq
        %v500 = vshrl.u32 %v499, 7
        %v501 = vsub.s32 0, %v500
        %v502 = vrot.slane %v497, %v501
        %v504 = vadd.f32 %v459, %v502
        %v505 = vadd.f32 %v464, %v502
        %v506 = vadd.f32 %v469, %v502
        %v507 = vadd.f32 %v474, %v502
        %v508 = vadd.f32 %v479, %v502
        %v509 = vadd.f32 %v484, %v502
        %v510 = vadd.f32 %v489, %v502
        %v511 = vadd.f32 %v494, %v502
        %512 = vst.msk [vmem:[%s216] sm:$0xff] %vm238, %v504
        %513 = vst.msk [vmem:[%s216 + $0x8] sm:$0xff] %vm238, %v505
        %514 = vst.msk [vmem:[%s216 + $0x10] sm:$0xff] %vm238, %v506
        %515 = vst.msk [vmem:[%s216 + $0x18] sm:$0xff] %vm238, %v507
        %516 = vst.msk [vmem:[%s216 + $0x20] sm:$0xff] %vm238, %v508
        %517 = vst.msk [vmem:[%s216 + $0x28] sm:$0xff] %vm238, %v509
        %518 = vst.msk [vmem:[%s216 + $0x30] sm:$0xff] %vm238, %v510
        %519 = vst.msk [vmem:[%s216 + $0x38] sm:$0xff] %vm238, %v511
        %s520 = sand.u32 %s97, 1
        %s521 = scalar_lea.sflag [#allocation4], %s520
        %s522 = sand.u32 %s97, 1
        %s523 = smul.addr %s522, 64
        %s524 = scalar_lea.vmem [#allocation8], %s523
        // Predicated region
        $region45: #{tpu_custom_call.1} parent=31 // pred_check
          %p525 = pneg %p107
        $region46: #{tpu_custom_call.1} parent=31 // pred_check_branch
          %527 = sbr.rel (%p525) target = $region48
        $region47: #{tpu_custom_call.1} parent=31 // pred_region
          %s528 = smul.u32 8, %s21
          %s530 = ssub.s32 1024, 1024
          %531 = vsyncadd %s521, %s530
          %s532 = smul.addr %s528, 128
          %s533 = scalar_lea.hbm %s3, %s532
          %s534 = sshll.u32 %s524, 4
          %s535 = int_to_ptr.vmem [resolvable:$true] %s534
          %540 = dma.vmem_to_hbm [thread:$0]  %s535, 1024, %s533, %s521, 128, 128, 8
        $region48: #{tpu_custom_call.1} parent=31 // pred_fallthru
          _
      $region32: #{tpu_custom_call.1} parent=5 // pred_fallthru
        _
      %p541 = scmp.le.s32.totalorder 2, %s16
      // Predicated region
      $region49: #{tpu_custom_call.1} parent=5 // pred_check
        %p542 = pneg %p541
      $region50: #{tpu_custom_call.1} parent=5 // pred_check_branch
        %544 = sbr.rel (%p542) target = $region52
      $region51: #{tpu_custom_call.1} parent=5 // pred_region
        %s545 = ssub.s32 %s16, 2
        // Predicated region
        $region53: #{tpu_custom_call.1} parent=51 // pred_check
          %p546 = pneg %p113
        $region54: #{tpu_custom_call.1} parent=51 // pred_check_branch
          %548 = sbr.rel (%p546) target = $region56
        $region55: #{tpu_custom_call.1} parent=51 // pred_region
          %s549 = sand.u32 %s98, 1
          %s550 = scalar_lea.sflag [#allocation4], %s549
          %s551 = sand.u32 %s98, 1
          %s552 = smul.addr %s551, 64
          %s553 = scalar_lea.vmem [#allocation8], %s552
          %554 = dma.done %s550, 1024
        $region56: #{tpu_custom_call.1} parent=51 // pred_fallthru
          _
      $region52: #{tpu_custom_call.1} parent=5 // pred_fallthru
        _
    $region6: #{tpu_custom_call.1} parent=1 // loop_footer
      %s20 = sadd.s32 1, %s16
    $region7: #{tpu_custom_call.1} parent=1 // loop_footer_branch
      %15 = sbr.rel target = $region3
    $region8: #{tpu_custom_call.1} parent=1 // loop_exit
      _
    %555 = vsyncpa [#allocation3], 1
    %s556 = scalar_lea.sflag [#allocation3], 1
    %557 = vsyncpa %s556, 1
    %558 = vsyncpa [#allocation6], 1
    %559 = vsyncpa [#allocation4], 1
    %s560 = scalar_lea.sflag [#allocation4], 1
    %561 = vsyncpa %s560, 1

</llo_original>
